<compile_context>
chip_gen: v7x
topology: tpu7x:2x2x1
jax: 0.10.0
libtpu: 0.0.40
codegen_flags: <defaults>
</compile_context>

<pallas_src>
import functools

import jax
import jax.numpy as jnp
from jax.experimental import pallas as pl
from jax.experimental.pallas import tpu as pltpu

_EPS = 2.2204e-16          # same eps as the PyTorch reference
_NUM_PASSES = {"cc": 1, "nss": 1, "kldiv": 2, "sim": 2}


def _make_kernel(loss_type: str, n_elems: int):
    n = float(n_elems)
    inv_n = 1.0 / n
    num_passes = _NUM_PASSES[loss_type]

    def kernel(pred_ref, gt_ref, out_ref, stat_ref):
        # grid = (batch, pass, m_tile); stat rows are per-lane partials and are
        # reset at the start of every sample.
        p_id = pl.program_id(1)
        j = pl.program_id(2)
        is_first = jnp.logical_and(p_id == 0, j == 0)
        is_last = jnp.logical_and(p_id == num_passes - 1,
                                  j == pl.num_programs(2) - 1)

        @pl.when(is_first)
        def _init():
            stat_ref[...] = jnp.zeros_like(stat_ref)
            if loss_type == "sim":
                inf_row = jnp.full((128,), jnp.inf, dtype=jnp.float32)
                stat_ref[2] = inf_row   # running min(pred)
                stat_ref[3] = inf_row   # running min(gt)

        p = pred_ref[...].astype(jnp.float32)   # (1, TM, 128) tile of one map
        g = gt_ref[...].astype(jnp.float32)

        if loss_type == "cc":
            stat_ref[0] += jnp.sum(p, axis=(0, 1))
            stat_ref[1] += jnp.sum(g, axis=(0, 1))
            stat_ref[2] += jnp.sum(p * g, axis=(0, 1))
            stat_ref[3] += jnp.sum(p * p, axis=(0, 1))
            stat_ref[4] += jnp.sum(g * g, axis=(0, 1))

            @pl.when(is_last)
            def _finalize():
                sp, sg = jnp.sum(stat_ref[0]), jnp.sum(stat_ref[1])
                spg = jnp.sum(stat_ref[2])
                spp, sgg = jnp.sum(stat_ref[3]), jnp.sum(stat_ref[4])
                cov = spg - sp * sg * inv_n
                var_p = spp - sp * sp * inv_n
                var_g = sgg - sg * sg * inv_n
                val = cov / jnp.sqrt(var_p * var_g)
                out_ref[...] = jnp.full(out_ref.shape, val, jnp.float32)

        elif loss_type == "nss":
            mask = (g > 0.0).astype(jnp.float32)
            stat_ref[0] += jnp.sum(p, axis=(0, 1))
            stat_ref[1] += jnp.sum(p * p, axis=(0, 1))
            stat_ref[2] += jnp.sum(p * mask, axis=(0, 1))
            stat_ref[3] += jnp.sum(mask, axis=(0, 1))

            @pl.when(is_last)
            def _finalize():
                sp, spp = jnp.sum(stat_ref[0]), jnp.sum(stat_ref[1])
                spm, sm = jnp.sum(stat_ref[2]), jnp.sum(stat_ref[3])
                mean_p = sp * inv_n
                # torch.std default is the unbiased estimator (divide by N-1)
                std_p = jnp.sqrt((spp - sp * sp * inv_n) / (n - 1.0))
                val = (spm - mean_p * sm) / (std_p * sm)
                out_ref[...] = jnp.full(out_ref.shape, val, jnp.float32)

        elif loss_type == "kldiv":
            @pl.when(p_id == 0)
            def _pass0():                       # global sums of both maps
                stat_ref[0] += jnp.sum(p, axis=(0, 1))
                stat_ref[1] += jnp.sum(g, axis=(0, 1))

            @pl.when(p_id == 1)
            def _pass1():                       # KL term, scalar reciprocals
                inv_sp = 1.0 / jnp.sum(stat_ref[0])
                inv_sg = 1.0 / jnp.sum(stat_ref[1])
                p_n = p * inv_sp
                g_n = g * inv_sg
                ratio = g_n * pl.reciprocal(p_n + _EPS, approx=True)
                stat_ref[4] += jnp.sum(g_n * jnp.log(_EPS + ratio), axis=(0, 1))

            @pl.when(is_last)
            def _finalize():
                out_ref[...] = jnp.full(out_ref.shape, jnp.sum(stat_ref[4]),
                                        jnp.float32)

        elif loss_type == "sim":
            @pl.when(p_id == 0)
            def _pass0():                       # global sums and minima
                stat_ref[0] += jnp.sum(p, axis=(0, 1))
                stat_ref[1] += jnp.sum(g, axis=(0, 1))
                stat_ref[2] = jnp.minimum(stat_ref[2], jnp.min(p, axis=(0, 1)))
                stat_ref[3] = jnp.minimum(stat_ref[3], jnp.min(g, axis=(0, 1)))

            @pl.when(p_id == 1)
            def _pass1():
                # ((x - xmin)/(xmax - xmin)) / sum(...) == (x - xmin)/(sum(x) - n*xmin)
                sp, sg = jnp.sum(stat_ref[0]), jnp.sum(stat_ref[1])
                pmin = jnp.min(stat_ref[2])
                gmin = jnp.min(stat_ref[3])
                scale_p = 1.0 / (sp - n * pmin)
                scale_g = 1.0 / (sg - n * gmin)
                p_n = (p - pmin) * scale_p
                g_n = (g - gmin) * scale_g
                stat_ref[4] += jnp.sum(jnp.minimum(g_n, p_n), axis=(0, 1))

            @pl.when(is_last)
            def _finalize():
                out_ref[...] = jnp.full(out_ref.shape, jnp.sum(stat_ref[4]),
                                        jnp.float32)
        else:
            raise ValueError(f"unknown loss_type {loss_type}")

    return kernel


def _largest_divisor(m: int, cap: int) -> int:
    for d in range(min(m, cap), 0, -1):
        if m % d == 0:
            return d
    return 1


@functools.partial(jax.jit, static_argnames=("loss_type",))
def saliency_loss(preds, labels, loss_type: str = "cc"):
    """Matches SaliencyLoss.forward: returns the (1,)-shaped batch-mean loss."""
    assert preds.shape == labels.shape
    assert loss_type in _NUM_PASSES
    b = preds.shape[0]
    n = 1
    for d in preds.shape[1:]:
        n *= int(d)
    # TODO(synk): pad + mask instead of asserting when the per-sample element
    # count is not a multiple of 128.
    assert n % 128 == 0, "per-sample element count must be a multiple of 128"
    m = n // 128
    tm = _largest_divisor(m, 1024)          # <= ~512 KiB f32 per input tile
    mt = m // tm
    num_passes = _NUM_PASSES[loss_type]

    # No dtype cast here: keep HBM traffic at the native (possibly bf16) width.
    p = preds.reshape(b, m, 128)
    g = labels.reshape(b, m, 128)

    kernel = _make_kernel(loss_type, n)

    per_sample = pl.pallas_call(
        kernel,
        out_shape=jax.ShapeDtypeStruct((b, 8, 128), jnp.float32),
        grid=(b, num_passes, mt),
        in_specs=[
            pl.BlockSpec((1, tm, 128), lambda bi, pi, ji: (bi, ji, 0)),
            pl.BlockSpec((1, tm, 128), lambda bi, pi, ji: (bi, ji, 0)),
        ],
        out_specs=pl.BlockSpec((1, 8, 128), lambda bi, pi, ji: (bi, 0, 0)),
        scratch_shapes=[pltpu.VMEM((8, 128), jnp.float32)],
        compiler_params=pltpu.CompilerParams(
            # batch axis shards across TensorCores (v7x megacore); pass / tile
            # axes carry the per-sample accumulator state and stay sequential.
            dimension_semantics=("parallel", "arbitrary", "arbitrary"),
            vmem_limit_bytes=32 * 1024 * 1024,
        ),
    )(p, g)

    return jnp.mean(per_sample[:, 0, 0]).reshape(1)


def _reference(preds, labels, loss_type):
    """Pure-JAX transcription of the PyTorch reference (for validation)."""
    p = preds.reshape(preds.shape[0], -1).astype(jnp.float32)
    g = labels.reshape(labels.shape[0], -1).astype(jnp.float32)
    if loss_type == "cc":
        pc = p - p.mean(axis=1, keepdims=True)
        gc = g - g.mean(axis=1, keepdims=True)
        v = (gc * pc).sum(1) / jnp.sqrt((gc * gc).sum(1) * (pc * pc).sum(1))
    elif loss_type == "kldiv":
        pn = p / p.sum(1, keepdims=True)
        gn = g / g.sum(1, keepdims=True)
        v = (gn * jnp.log(_EPS + gn / (pn + _EPS))).sum(1)
    elif loss_type == "nss":
        pz = (p - p.mean(1, keepdims=True)) / jnp.std(p, axis=1, ddof=1,
                                                      keepdims=True)
        mask = (g > 0).astype(jnp.float32)
        v = (pz * mask).sum(1) / mask.sum(1)
    else:  # sim
        g01 = (g - g.min(1, keepdims=True)) / (
            g.max(1, keepdims=True) - g.min(1, keepdims=True))
        gn = g01 / g01.sum(1, keepdims=True)
        p01 = (p - p.min(1, keepdims=True)) / (
            p.max(1, keepdims=True) - p.min(1, keepdims=True))
        pn = p01 / p01.sum(1, keepdims=True)
        v = jnp.minimum(gn, pn).sum(1)
    return jnp.mean(v).reshape(1)


if __name__ == "__main__":
    key = jax.random.PRNGKey(0)
    k1, k2, k3 = jax.random.split(key, 3)

    # Saliency maps: (B, C, H, W) NCHW, positive values (soft maps)
    B, C, H, W = 2, 4, 16, 16
    preds = jax.random.uniform(k1, (B, C, H, W), jnp.float32, 1e-3, 1.0)
    labels = jax.random.uniform(k2, (B, C, H, W), jnp.float32, 1e-3, 1.0)
    # Fixation map for NSS: sparse binary map
    fix = (jax.random.uniform(k3, (B, C, H, W)) > 0.7).astype(jnp.float32)

    for lt, gt_map in (("cc", labels), ("kldiv", labels),
                       ("sim", labels), ("nss", fix)):
        out = saliency_loss(preds, gt_map, loss_type=lt)
        jax.block_until_ready(out)
        assert out.shape == (1,)
        ref = _reference(preds, gt_map, lt)
        err = float(jnp.abs(out - ref)[0])
        tol = 2e-2 + 2e-2 * float(jnp.abs(ref)[0])
        assert err <= tol, f"{lt}: kernel={out} ref={ref} err={err}"

    print("KERNEL_OK")
</pallas_src>

<mosaic_0001>
module attributes {stable_mosaic.version = 11 : i64} {
  func.func @kernel(%arg0: i32, %arg1: i32, %arg2: i32, %arg3: memref<1x8x128xf32, #tpu.memory_space<vmem>>, %arg4: memref<1x8x128xf32, #tpu.memory_space<vmem>>, %arg5: memref<1x8x128xf32, #tpu.memory_space<vmem>>, %arg6: memref<8x128xf32, #tpu.memory_space<vmem>>) attributes {dimension_semantics = [#tpu.dimension_semantics<parallel>, #tpu.dimension_semantics<arbitrary>, #tpu.dimension_semantics<arbitrary>], iteration_bounds = array<i64: 2, 1, 1>, scalar_prefetch = 0 : i64, scratch_operands = 1 : i64, tpu.core_type = #tpu.core_type<tc>, window_params = [{transform_indices = @transform_0, window_bounds = array<i64: 1, 8, 128>}, {transform_indices = @transform_1, window_bounds = array<i64: 1, 8, 128>}, {transform_indices = @transform_2, window_bounds = array<i64: 1, 8, 128>}]} {
    %c0_i32 = arith.constant 0 : i32
    %0 = arith.cmpi eq, %arg1, %c0_i32 : i32
    %c0_i32_0 = arith.constant 0 : i32
    %1 = arith.cmpi eq, %arg2, %c0_i32_0 : i32
    %2 = arith.andi %0, %1 : i1
    %c0_i32_1 = arith.constant 0 : i32
    %3 = arith.cmpi eq, %arg1, %c0_i32_1 : i32
    %c0_i32_2 = arith.constant 0 : i32
    %4 = arith.cmpi eq, %arg2, %c0_i32_2 : i32
    %5 = arith.andi %3, %4 : i1
    %6 = arith.extui %2 : i1 to i32
    %c0_i32_3 = arith.constant 0 : i32
    %7 = arith.cmpi ne, %6, %c0_i32_3 : i32
    scf.if %7 {
      %cst_30 = arith.constant 0.000000e+00 : f32
      %50 = vector.broadcast %cst_30 : f32 to vector<8x128xf32>
      %c0_31 = arith.constant 0 : index
      %c0_32 = arith.constant 0 : index
      %51 = vector.load %arg6[%c0_31, %c0_32] : memref<8x128xf32, #tpu.memory_space<vmem>>, vector<8x128xf32>
      tpu.vector_store %arg6[%c0_31, %c0_32], %50 {strides = array<i32>} : memref<8x128xf32, #tpu.memory_space<vmem>>, vector<8x128xf32>,
    } else {
    }
    %c0 = arith.constant 0 : index
    %c0_4 = arith.constant 0 : index
    %c0_5 = arith.constant 0 : index
    %8 = vector.load %arg3[%c0, %c0_4, %c0_5] : memref<1x8x128xf32, #tpu.memory_space<vmem>>, vector<1x8x128xf32>
    %c0_6 = arith.constant 0 : index
    %c0_7 = arith.constant 0 : index
    %c0_8 = arith.constant 0 : index
    %9 = vector.load %arg4[%c0_6, %c0_7, %c0_8] : memref<1x8x128xf32, #tpu.memory_space<vmem>>, vector<1x8x128xf32>
    %c0_9 = arith.constant 0 : index
    %c0_10 = arith.constant 0 : index
    %10 = vector.load %arg6[%c0_9, %c0_10] : memref<8x128xf32, #tpu.memory_space<vmem>>, vector<1x128xf32>
    %11 = vector.shape_cast %10 : vector<1x128xf32> to vector<128xf32>
    %cst = arith.constant dense<0.000000e+00> : vector<128xf32>
    %12 = vector.multi_reduction <add>, %8, %cst [0, 1] : vector<1x8x128xf32> to vector<128xf32>
    %13 = arith.addf %11, %12 : vector<128xf32>
    %c0_11 = arith.constant 0 : index
    %c0_12 = arith.constant 0 : index
    %14 = vector.load %arg6[%c0_11, %c0_12] : memref<8x128xf32, #tpu.memory_space<vmem>>, vector<1x128xf32>
    %15 = vector.shape_cast %14 : vector<1x128xf32> to vector<128xf32>
    %16 = vector.shape_cast %13 : vector<128xf32> to vector<1x128xf32>
    tpu.vector_store %arg6[%c0_11, %c0_12], %16 {strides = array<i32>} : memref<8x128xf32, #tpu.memory_space<vmem>>, vector<1x128xf32>,
    %c1 = arith.constant 1 : index
    %c0_13 = arith.constant 0 : index
    %17 = vector.load %arg6[%c1, %c0_13] : memref<8x128xf32, #tpu.memory_space<vmem>>, vector<1x128xf32>
    %18 = vector.shape_cast %17 : vector<1x128xf32> to vector<128xf32>
    %cst_14 = arith.constant dense<0.000000e+00> : vector<128xf32>
    %19 = vector.multi_reduction <add>, %9, %cst_14 [0, 1] : vector<1x8x128xf32> to vector<128xf32>
    %20 = arith.addf %18, %19 : vector<128xf32>
    %c1_15 = arith.constant 1 : index
    %c0_16 = arith.constant 0 : index
    %21 = vector.load %arg6[%c1_15, %c0_16] : memref<8x128xf32, #tpu.memory_space<vmem>>, vector<1x128xf32>
    %22 = vector.shape_cast %21 : vector<1x128xf32> to vector<128xf32>
    %23 = vector.shape_cast %20 : vector<128xf32> to vector<1x128xf32>
    tpu.vector_store %arg6[%c1_15, %c0_16], %23 {strides = array<i32>} : memref<8x128xf32, #tpu.memory_space<vmem>>, vector<1x128xf32>,
    %c2 = arith.constant 2 : index
    %c0_17 = arith.constant 0 : index
    %24 = vector.load %arg6[%c2, %c0_17] : memref<8x128xf32, #tpu.memory_space<vmem>>, vector<1x128xf32>
    %25 = vector.shape_cast %24 : vector<1x128xf32> to vector<128xf32>
    %26 = arith.mulf %8, %9 : vector<1x8x128xf32>
    %cst_18 = arith.constant dense<0.000000e+00> : vector<128xf32>
    %27 = vector.multi_reduction <add>, %26, %cst_18 [0, 1] : vector<1x8x128xf32> to vector<128xf32>
    %28 = arith.addf %25, %27 : vector<128xf32>
    %c2_19 = arith.constant 2 : index
    %c0_20 = arith.constant 0 : index
    %29 = vector.load %arg6[%c2_19, %c0_20] : memref<8x128xf32, #tpu.memory_space<vmem>>, vector<1x128xf32>
    %30 = vector.shape_cast %29 : vector<1x128xf32> to vector<128xf32>
    %31 = vector.shape_cast %28 : vector<128xf32> to vector<1x128xf32>
    tpu.vector_store %arg6[%c2_19, %c0_20], %31 {strides = array<i32>} : memref<8x128xf32, #tpu.memory_space<vmem>>, vector<1x128xf32>,
    %c3 = arith.constant 3 : index
    %c0_21 = arith.constant 0 : index
    %32 = vector.load %arg6[%c3, %c0_21] : memref<8x128xf32, #tpu.memory_space<vmem>>, vector<1x128xf32>
    %33 = vector.shape_cast %32 : vector<1x128xf32> to vector<128xf32>
    %34 = arith.mulf %8, %8 : vector<1x8x128xf32>
    %cst_22 = arith.constant dense<0.000000e+00> : vector<128xf32>
    %35 = vector.multi_reduction <add>, %34, %cst_22 [0, 1] : vector<1x8x128xf32> to vector<128xf32>
    %36 = arith.addf %33, %35 : vector<128xf32>
    %c3_23 = arith.constant 3 : index
    %c0_24 = arith.constant 0 : index
    %37 = vector.load %arg6[%c3_23, %c0_24] : memref<8x128xf32, #tpu.memory_space<vmem>>, vector<1x128xf32>
    %38 = vector.shape_cast %37 : vector<1x128xf32> to vector<128xf32>
    %39 = vector.shape_cast %36 : vector<128xf32> to vector<1x128xf32>
    tpu.vector_store %arg6[%c3_23, %c0_24], %39 {strides = array<i32>} : memref<8x128xf32, #tpu.memory_space<vmem>>, vector<1x128xf32>,
    %c4 = arith.constant 4 : index
    %c0_25 = arith.constant 0 : index
    %40 = vector.load %arg6[%c4, %c0_25] : memref<8x128xf32, #tpu.memory_space<vmem>>, vector<1x128xf32>
    %41 = vector.shape_cast %40 : vector<1x128xf32> to vector<128xf32>
    %42 = arith.mulf %9, %9 : vector<1x8x128xf32>
    %cst_26 = arith.constant dense<0.000000e+00> : vector<128xf32>
    %43 = vector.multi_reduction <add>, %42, %cst_26 [0, 1] : vector<1x8x128xf32> to vector<128xf32>
    %44 = arith.addf %41, %43 : vector<128xf32>
    %c4_27 = arith.constant 4 : index
    %c0_28 = arith.constant 0 : index
    %45 = vector.load %arg6[%c4_27, %c0_28] : memref<8x128xf32, #tpu.memory_space<vmem>>, vector<1x128xf32>
    %46 = vector.shape_cast %45 : vector<1x128xf32> to vector<128xf32>
    %47 = vector.shape_cast %44 : vector<128xf32> to vector<1x128xf32>
    tpu.vector_store %arg6[%c4_27, %c0_28], %47 {strides = array<i32>} : memref<8x128xf32, #tpu.memory_space<vmem>>, vector<1x128xf32>,
    %48 = arith.extui %5 : i1 to i32
    %c0_i32_29 = arith.constant 0 : i32
    %49 = arith.cmpi ne, %48, %c0_i32_29 : i32
    scf.if %49 {
      %c0_30 = arith.constant 0 : index
      %c0_31 = arith.constant 0 : index
      %50 = vector.load %arg6[%c0_30, %c0_31] : memref<8x128xf32, #tpu.memory_space<vmem>>, vector<1x128xf32>
      %51 = vector.shape_cast %50 : vector<1x128xf32> to vector<128xf32>
      %52 = vector.shape_cast %51 : vector<128xf32> to vector<1x128xf32>
      %cst_32 = arith.constant dense<0.000000e+00> : vector<1xf32>
      %53 = vector.multi_reduction <add>, %52, %cst_32 [1] : vector<1x128xf32> to vector<1xf32>
      %54 = vector.shape_cast %53 : vector<1xf32> to vector<1x1xf32>
      %55 = vector.extract %54[0, 0] : f32 from vector<1x1xf32>
      %c1_33 = arith.constant 1 : index
      %c0_34 = arith.constant 0 : index
      %56 = vector.load %arg6[%c1_33, %c0_34] : memref<8x128xf32, #tpu.memory_space<vmem>>, vector<1x128xf32>
      %57 = vector.shape_cast %56 : vector<1x128xf32> to vector<128xf32>
      %58 = vector.shape_cast %57 : vector<128xf32> to vector<1x128xf32>
      %cst_35 = arith.constant dense<0.000000e+00> : vector<1xf32>
      %59 = vector.multi_reduction <add>, %58, %cst_35 [1] : vector<1x128xf32> to vector<1xf32>
      %60 = vector.shape_cast %59 : vector<1xf32> to vector<1x1xf32>
      %61 = vector.extract %60[0, 0] : f32 from vector<1x1xf32>
      %c2_36 = arith.constant 2 : index
      %c0_37 = arith.constant 0 : index
      %62 = vector.load %arg6[%c2_36, %c0_37] : memref<8x128xf32, #tpu.memory_space<vmem>>, vector<1x128xf32>
      %63 = vector.shape_cast %62 : vector<1x128xf32> to vector<128xf32>
      %64 = vector.shape_cast %63 : vector<128xf32> to vector<1x128xf32>
      %cst_38 = arith.constant dense<0.000000e+00> : vector<1xf32>
      %65 = vector.multi_reduction <add>, %64, %cst_38 [1] : vector<1x128xf32> to vector<1xf32>
      %66 = vector.shape_cast %65 : vector<1xf32> to vector<1x1xf32>
      %67 = vector.extract %66[0, 0] : f32 from vector<1x1xf32>
      %c3_39 = arith.constant 3 : index
      %c0_40 = arith.constant 0 : index
      %68 = vector.load %arg6[%c3_39, %c0_40] : memref<8x128xf32, #tpu.memory_space<vmem>>, vector<1x128xf32>
      %69 = vector.shape_cast %68 : vector<1x128xf32> to vector<128xf32>
      %70 = vector.shape_cast %69 : vector<128xf32> to vector<1x128xf32>
      %cst_41 = arith.constant dense<0.000000e+00> : vector<1xf32>
      %71 = vector.multi_reduction <add>, %70, %cst_41 [1] : vector<1x128xf32> to vector<1xf32>
      %72 = vector.shape_cast %71 : vector<1xf32> to vector<1x1xf32>
      %73 = vector.extract %72[0, 0] : f32 from vector<1x1xf32>
      %c4_42 = arith.constant 4 : index
      %c0_43 = arith.constant 0 : index
      %74 = vector.load %arg6[%c4_42, %c0_43] : memref<8x128xf32, #tpu.memory_space<vmem>>, vector<1x128xf32>
      %75 = vector.shape_cast %74 : vector<1x128xf32> to vector<128xf32>
      %76 = vector.shape_cast %75 : vector<128xf32> to vector<1x128xf32>
      %cst_44 = arith.constant dense<0.000000e+00> : vector<1xf32>
      %77 = vector.multi_reduction <add>, %76, %cst_44 [1] : vector<1x128xf32> to vector<1xf32>
      %78 = vector.shape_cast %77 : vector<1xf32> to vector<1x1xf32>
      %79 = vector.extract %78[0, 0] : f32 from vector<1x1xf32>
      %80 = arith.mulf %55, %61 : f32
      %cst_45 = arith.constant 9.765625E-4 : f32
      %81 = arith.mulf %80, %cst_45 : f32
      %82 = arith.subf %67, %81 : f32
      %83 = arith.mulf %55, %55 : f32
      %cst_46 = arith.constant 9.765625E-4 : f32
      %84 = arith.mulf %83, %cst_46 : f32
      %85 = arith.subf %73, %84 : f32
      %86 = arith.mulf %61, %61 : f32
      %cst_47 = arith.constant 9.765625E-4 : f32
      %87 = arith.mulf %86, %cst_47 : f32
      %88 = arith.subf %79, %87 : f32
      %89 = arith.mulf %85, %88 : f32
      %90 = math.sqrt %89 : f32
      %91 = arith.divf %82, %90 : f32
      %92 = vector.broadcast %91 : f32 to vector<1x8x128xf32>
      %c0_48 = arith.constant 0 : index
      %c0_49 = arith.constant 0 : index
      %c0_50 = arith.constant 0 : index
      %93 = vector.load %arg5[%c0_48, %c0_49, %c0_50] : memref<1x8x128xf32, #tpu.memory_space<vmem>>, vector<1x8x128xf32>
      tpu.vector_store %arg5[%c0_48, %c0_49, %c0_50], %92 {strides = array<i32>} : memref<1x8x128xf32, #tpu.memory_space<vmem>>, vector<1x8x128xf32>,
    } else {
    }
    return
  }
  func.func @transform_0(%arg0: i32, %arg1: i32, %arg2: i32) -> (i32, i32, i32) {
    %c0_i32 = arith.constant 0 : i32
    %c0_i32_0 = arith.constant 0 : i32
    return %arg0, %arg2, %c0_i32 : i32, i32, i32
  }
  func.func @transform_1(%arg0: i32, %arg1: i32, %arg2: i32) -> (i32, i32, i32) {
    %c0_i32 = arith.constant 0 : i32
    %c0_i32_0 = arith.constant 0 : i32
    return %arg0, %arg2, %c0_i32 : i32, i32, i32
  }
  func.func @transform_2(%arg0: i32, %arg1: i32, %arg2: i32) -> (i32, i32, i32) {
    %c0_i32 = arith.constant 0 : i32
    %c0_i32_0 = arith.constant 0 : i32
    %c0_i32_1 = arith.constant 0 : i32
    return %arg0, %c0_i32, %c0_i32_0 : i32, i32, i32
  }
}

</mosaic_0001>

<llo_original>
// kernel: saliency_loss.1
$region0: #{saliency_loss.1}
  #allocation0 [shape = 'u32[]', space=smem, size = 0x4, offset = 0x4, fixed_abs, tag = 'smem constant byte address 0x4 - core index']
  #allocation1 [shape = 'u32[144,128]{1,0:T(1,128)}', space=vmem, size = 0x12000, scoped, tag = 'internal scratch']
  #allocation2 [shape = 'f32[8,128]{1,0:T(8,128)}', space=vmem, size = 0x1000, scoped, tag = 'scratch operand']
  %s0 = inlined_call_operand.vmem [shape: f32[2,8,128], index: 0, kind: input, shape index: {}]
  %s1 = inlined_call_operand.vmem [shape: f32[2,8,128], index: 1, kind: input, shape index: {}]
  %s2 = inlined_call_operand.vmem [shape: f32[2,8,128], index: 2, kind: output, shape index: {}]
  %s3 = sld [smem:[#allocation0]]
  $region49: #{saliency_loss.1} parent=0
    _
  %s5 = ssub.s32 1, %s3
  %s6 = scalar_select 0, %s5, %s3
  loop: start=0, step=1, limit=4
  $region2: #{saliency_loss.1} parent=0 // loop_pre_header
    _
  $region3: #{saliency_loss.1} parent=0 // loop_header
    %s8 = sphi 0, %s12
    %p9 = scmp.ge.s32.totalorder %s8, 4
    %s15 = sphi 0, %s34
    %s16 = sphi 0, %s30
    %s17 = sphi 0, %s26
    %s18 = sphi 0, %s15
    %s19 = sphi 0, %s16
    %s20 = sphi 0, %s17
    %s21 = sphi 0, %s18
    %s22 = sphi 0, %s19
    %s23 = sphi 0, %s20
    %s39 = sphi 0, %s41
    %s42 = sphi 0, %s39
    %s43 = sphi 0, %s42
    %s59 = sphi 0, %s43
    %s67 = sphi 0, %s69
    %s70 = sphi 0, %s67
    %s71 = sphi 0, %s70
    %s87 = sphi 0, %s71
    %s93 = sphi 0, %s95
    %s96 = sphi 0, %s93
    %s97 = sphi 0, %s96
    %s113 = sphi 0, %s97
  $region4: #{saliency_loss.1} parent=0 // loop_header_branch
    %11 = sbr.rel (%p9) target = $region8
  $region5: #{saliency_loss.1} parent=0 // loop_body
    %s13 = ssub.s32 %s8, 1
    %s14 = ssub.s32 %s8, 2
    %s24 = sadd.s32 1, %s17
    %p25 = scmp.ge.s32.totalorder %s24, 1
    %s26 = scalar_select %p25, 0, %s24
    %s27 = sadd.s32 1, %s16
    %s28 = scalar_select %p25, %s27, %s16
    %p29 = scmp.ge.s32.totalorder %s28, 1
    %s30 = scalar_select %p29, 0, %s28
    %s31 = sadd.s32 1, %s15
    %s32 = scalar_select %p29, %s31, %s15
    %p33 = scmp.ge.s32.totalorder %s32, 2
    %s34 = scalar_select %p33, 0, %s32
    %s35 = ssub.s32 %s15, %s34
    %s36 = ssub.s32 %s17, %s26
    %s37 = sor.u32 %s35, %s36
    %p38 = scmp.eq.s32.totalorder %s37, 0
    %s40 = sadd.s32 %s39, 1
    %s41 = scalar_select %p38, %s39, %s40
    %p44 = pneg %p38
    %p45 = scmp.eq.s32.totalorder %s8, 1
    %p46 = por %p44, %p45
    %p47 = scmp.ne.s32.totalorder %s39, %s42
    %p48 = scmp.eq.s32.totalorder %s8, 0
    %p49 = por %p47, %p48
    %p50 = scmp.ne.s32.totalorder %s39, %s42
    %p51 = scmp.eq.s32.totalorder %s13, 1
    %p52 = por %p50, %p51
    %p53 = scmp.ne.s32.totalorder %s42, %s43
    %p54 = scmp.eq.s32.totalorder %s13, 0
    %p55 = por %p53, %p54
    %p56 = scmp.ne.s32.totalorder %s42, %s43
    %p57 = scmp.eq.s32.totalorder %s14, 1
    %p58 = por %p56, %p57
    %p60 = scmp.ne.s32.totalorder %s43, %s59
    %p61 = scmp.eq.s32.totalorder %s14, 0
    %p62 = por %p60, %p61
    %s63 = ssub.s32 %s15, %s34
    %s64 = ssub.s32 %s17, %s26
    %s65 = sor.u32 %s63, %s64
    %p66 = scmp.eq.s32.totalorder %s65, 0
    %s68 = sadd.s32 %s67, 1
    %s69 = scalar_select %p66, %s67, %s68
    %p72 = pneg %p66
    %p73 = scmp.eq.s32.totalorder %s8, 1
    %p74 = por %p72, %p73
    %p75 = scmp.ne.s32.totalorder %s67, %s70
    %p76 = scmp.eq.s32.totalorder %s8, 0
    %p77 = por %p75, %p76
    %p78 = scmp.ne.s32.totalorder %s67, %s70
    %p79 = scmp.eq.s32.totalorder %s13, 1
    %p80 = por %p78, %p79
    %p81 = scmp.ne.s32.totalorder %s70, %s71
    %p82 = scmp.eq.s32.totalorder %s13, 0
    %p83 = por %p81, %p82
    %p84 = scmp.ne.s32.totalorder %s70, %s71
    %p85 = scmp.eq.s32.totalorder %s14, 1
    %p86 = por %p84, %p85
    %p88 = scmp.ne.s32.totalorder %s71, %s87
    %p89 = scmp.eq.s32.totalorder %s14, 0
    %p90 = por %p88, %p89
    %s91 = ssub.s32 %s15, %s34
    %p92 = scmp.eq.s32.totalorder %s91, 0
    %s94 = sadd.s32 %s93, 1
    %s95 = scalar_select %p92, %s93, %s94
    %p98 = pneg %p92
    %p99 = scmp.eq.s32.totalorder %s8, 1
    %p100 = por %p98, %p99
    %p101 = scmp.ne.s32.totalorder %s93, %s96
    %p102 = scmp.eq.s32.totalorder %s8, 0
    %p103 = por %p101, %p102
    %p104 = scmp.ne.s32.totalorder %s93, %s96
    %p105 = scmp.eq.s32.totalorder %s13, 1
    %p106 = por %p104, %p105
    %p107 = scmp.ne.s32.totalorder %s96, %s97
    %p108 = scmp.eq.s32.totalorder %s13, 0
    %p109 = por %p107, %p108
    %p110 = scmp.ne.s32.totalorder %s96, %s97
    %p111 = scmp.eq.s32.totalorder %s14, 1
    %p112 = por %p110, %p111
    %p114 = scmp.ne.s32.totalorder %s97, %s113
    %p115 = scmp.eq.s32.totalorder %s14, 0
    %p116 = por %p114, %p115
    %p117 = scmp.le.s32.totalorder 1, %s8
    %p118 = scmp.lt.s32.totalorder %s8, 3
    %p119 = pnand %p117, %p118
    %p120 = pneg %p119
    // Predicated region
    $region9: #{saliency_loss.1} parent=5 // pred_check
      _
    $region10: #{saliency_loss.1} parent=5 // pred_check_branch
      %122 = sbr.rel (%p119) target = $region12
    $region11: #{saliency_loss.1} parent=5 // pred_region
      %s123 = ssub.s32 %s8, 1
    $region12: #{saliency_loss.1} parent=5 // pred_fallthru
      _
    %p124 = scmp.lt.s32.totalorder %s8, 2
    // Predicated region
    $region13: #{saliency_loss.1} parent=5 // pred_check
      %p125 = pneg %p124
    $region14: #{saliency_loss.1} parent=5 // pred_check_branch
      %127 = sbr.rel (%p125) target = $region16
    $region15: #{saliency_loss.1} parent=5 // pred_region
      // Predicated region
      $region17: #{saliency_loss.1} parent=15 // pred_check
        %p128 = pneg %p49
      $region18: #{saliency_loss.1} parent=15 // pred_check_branch
        %130 = sbr.rel (%p128) target = $region20
      $region19: #{saliency_loss.1} parent=15 // pred_region
        %p131 = scmp.lt.s32.totalorder %s15, 1
        %s132 = scalar_select %p131, %s15, 1
        %p133 = scmp.lt.s32.totalorder %s17, 0
        %s134 = scalar_select %p133, %s17, 0
        %s135 = sadd.s32 %s134, %s132
        %s136 = smul.addr %s135, 8
        %s137 = scalar_lea.vmem %s0, %s136
      $region20: #{saliency_loss.1} parent=15 // pred_fallthru
        _
      // Predicated region
      $region21: #{saliency_loss.1} parent=15 // pred_check
        %p138 = pneg %p77
      $region22: #{saliency_loss.1} parent=15 // pred_check_branch
        %140 = sbr.rel (%p138) target = $region24
      $region23: #{saliency_loss.1} parent=15 // pred_region
        %p141 = scmp.lt.s32.totalorder %s15, 1
        %s142 = scalar_select %p141, %s15, 1
        %p143 = scmp.lt.s32.totalorder %s17, 0
        %s144 = scalar_select %p143, %s17, 0
        %s145 = sadd.s32 %s144, %s142
        %s146 = smul.addr %s145, 8
        %s147 = scalar_lea.vmem %s1, %s146
      $region24: #{saliency_loss.1} parent=15 // pred_fallthru
        _
    $region16: #{saliency_loss.1} parent=5 // pred_fallthru
      _
    %p148 = scmp.le.s32.totalorder 1, %s8
    %p149 = scmp.lt.s32.totalorder %s8, 3
    %p150 = pnand %p148, %p149
    %p151 = pneg %p150
    // Predicated region
    $region25: #{saliency_loss.1} parent=5 // pred_check
      _
    $region26: #{saliency_loss.1} parent=5 // pred_check_branch
      %153 = sbr.rel (%p150) target = $region28
    $region27: #{saliency_loss.1} parent=5 // pred_region
      %s154 = ssub.s32 %s8, 1
      %p155 = scmp.lt.s32.totalorder %s18, 1
      %s156 = scalar_select %p155, %s18, 1
      %p157 = scmp.lt.s32.totalorder %s20, 0
      %s158 = scalar_select %p157, %s20, 0
      %s159 = sadd.s32 %s158, %s156
      %s160 = smul.addr %s159, 8
      %s161 = scalar_lea.vmem %s0, %s160
      %p162 = pneg %p55
      %p163 = pneg %p52
      %p164 = scmp.lt.s32.totalorder %s18, 1
      %s165 = scalar_select %p164, %s18, 1
      %p166 = scmp.lt.s32.totalorder %s20, 0
      %s167 = scalar_select %p166, %s20, 0
      %s168 = sadd.s32 %s167, %s165
      %s169 = smul.addr %s168, 8
      %s170 = scalar_lea.vmem %s1, %s169
      %p171 = pneg %p83
      %p172 = pneg %p80
      %p173 = pneg %p109
      %p174 = pneg %p106
      %p175 = scmp.lt.s32.totalorder %s18, 1
      %s176 = scalar_select %p175, %s18, 1
      %s177 = smul.addr %s176, 8
      %s178 = scalar_lea.vmem %s2, %s177
      %p179 = scmp.lt.s32.totalorder %s18, 1
      %s180 = scalar_select %p179, %s18, 1
      %p181 = scmp.lt.s32.totalorder %s20, 0
      %s182 = scalar_select %p181, %s20, 0
      %s183 = sadd.s32 %s182, %s180
      %s184 = smul.addr %s183, 8
      %s185 = scalar_lea.vmem %s0, %s184
      %p186 = scmp.lt.s32.totalorder %s18, 1
      %s187 = scalar_select %p186, %s18, 1
      %p188 = scmp.lt.s32.totalorder %s20, 0
      %s189 = scalar_select %p188, %s20, 0
      %s190 = sadd.s32 %s189, %s187
      %s191 = smul.addr %s190, 8
      %s192 = scalar_lea.vmem %s1, %s191
      %p193 = scmp.lt.s32.totalorder %s18, 1
      %s194 = scalar_select %p193, %s18, 1
      %s195 = smul.addr %s194, 8
      %s196 = scalar_lea.vmem %s2, %s195
      %p197 = scmp.eq.s32.totalorder %s19, 0
      %p198 = scmp.eq.s32.totalorder %s20, 0
      %p199 = pnand %p197, %p198
      %p200 = pneg %p199
      // Predicated region
      $region29: #{saliency_loss.1} parent=27 // pred_check
        _
      $region30: #{saliency_loss.1} parent=27 // pred_check_branch
        %202 = sbr.rel (%p199) target = $region32
      $region31: #{saliency_loss.1} parent=27 // pred_region
        %203 = vst [vmem:[#allocation2] sm:$0xff] 0.0
      $region32: #{saliency_loss.1} parent=27 // pred_fallthru
        _
      %v204 = vld [vmem:[%s185] sm:$0xff]
      %v205 = vld [vmem:[%s192] sm:$0xff]
      %v206 = vld [vmem:[#allocation2] sm:$0x1]
      %v207 = vrot.slane %v204, 4
      %v208 = vadd.f32 %v204, %v207
      %v209 = vrot.slane %v208, 2
      %v210 = vadd.f32 %v208, %v209
      %v211 = vrot.slane %v210, 1
      %v212 = vadd.f32 %v210, %v211
      %v213 = vadd.f32 %v206, %v212
      %214 = vst [vmem:[#allocation2] sm:$0x1] %v213
      %v215 = vld [vmem:[#allocation2 + $0x1] sm:$0x1]
      %v216 = vrot.slane %v205, 4
      %v217 = vadd.f32 %v205, %v216
      %v218 = vrot.slane %v217, 2
      %v219 = vadd.f32 %v217, %v218
      %v220 = vrot.slane %v219, 1
      %v221 = vadd.f32 %v219, %v220
      %v222 = vadd.f32 %v215, %v221
      %223 = vst [vmem:[#allocation2 + $0x1] sm:$0x1] %v222
      %v224 = vld [vmem:[#allocation2 + $0x2] sm:$0x1]
      %v225 = vmul.f32 %v204, %v205
      %v226 = vrot.slane %v225, 4
      %v227 = vadd.f32 %v225, %v226
      %v228 = vrot.slane %v227, 2
      %v229 = vadd.f32 %v227, %v228
      %v230 = vrot.slane %v229, 1
      %v231 = vadd.f32 %v229, %v230
      %v232 = vadd.f32 %v224, %v231
      %233 = vst [vmem:[#allocation2 + $0x2] sm:$0x1] %v232
      %v234 = vld [vmem:[#allocation2 + $0x3] sm:$0x1]
      %v235 = vmul.f32 %v204, %v204
      %v236 = vrot.slane %v235, 4
      %v237 = vadd.f32 %v235, %v236
      %v238 = vrot.slane %v237, 2
      %v239 = vadd.f32 %v237, %v238
      %v240 = vrot.slane %v239, 1
      %v241 = vadd.f32 %v239, %v240
      %v242 = vadd.f32 %v234, %v241
      %243 = vst [vmem:[#allocation2 + $0x3] sm:$0x1] %v242
      %v244 = vld [vmem:[#allocation2 + $0x4] sm:$0x1]
      %v245 = vmul.f32 %v205, %v205
      %v246 = vrot.slane %v245, 4
      %v247 = vadd.f32 %v245, %v246
      %v248 = vrot.slane %v247, 2
      %v249 = vadd.f32 %v247, %v248
      %v250 = vrot.slane %v249, 1
      %v251 = vadd.f32 %v249, %v250
      %v252 = vadd.f32 %v244, %v251
      %253 = vst [vmem:[#allocation2 + $0x4] sm:$0x1] %v252
      // Predicated region
      $region33: #{saliency_loss.1} parent=27 // pred_check
        _
      $region34: #{saliency_loss.1} parent=27 // pred_check_branch
        %255 = sbr.rel (%p199) target = $region36
      $region35: #{saliency_loss.1} parent=27 // pred_region
        %v256 = vld [vmem:[#allocation2] sm:$0x1]
        %vm257 = vcmask 1040384
        %v258 = vsel %vm257, %v256, 0.0
        %259 = vadd.xlane.f32.xlu0 %v258
        %v260 = vpop.xlane.xlu0 %259
        %s261 = vtos %v260
        %v262 = vld [vmem:[#allocation2 + $0x1] sm:$0x1]
        %v263 = vsel %vm257, %v262, 0.0
        %264 = vadd.xlane.f32.xlu0 %v263
        %v265 = vpop.xlane.xlu0 %264
        %s266 = vtos %v265
        %v267 = vld [vmem:[#allocation2 + $0x2] sm:$0x1]
        %v268 = vsel %vm257, %v267, 0.0
        %269 = vadd.xlane.f32.xlu0 %v268
        %v270 = vpop.xlane.xlu0 %269
        %s271 = vtos %v270
        %v272 = vld [vmem:[#allocation2 + $0x3] sm:$0x1]
        %v273 = vsel %vm257, %v272, 0.0
        %274 = vadd.xlane.f32.xlu0 %v273
        %v275 = vpop.xlane.xlu0 %274
        %s276 = vtos %v275
        %v277 = vld [vmem:[#allocation2 + $0x4] sm:$0x1]
        %v278 = vsel %vm257, %v277, 0.0
        %279 = vadd.xlane.f32.xlu0 %v278
        %v280 = vpop.xlane.xlu0 %279
        %s281 = vtos %v280
        %s282 = smul.f32 %s261, %s266
        %s283 = smul.f32 %s282, 0.0009765625
        %s284 = ssub.f32 %s271, %s283
        %s285 = smul.f32 %s261, %s261
        %s286 = smul.f32 %s285, 0.0009765625
        %s287 = ssub.f32 %s276, %s286
        %s288 = smul.f32 %s266, %s266
        %s289 = smul.f32 %s288, 0.0009765625
        %s290 = ssub.f32 %s281, %s289
        %s291 = smul.f32 %s287, %s290
        %v292 = vstv %s291
        %v293 = vrsqrt.pop %v292
        %v294 = vmul.f32 %v292, %v293
        %vm295 = vcmp.eq.f32.partialorder %v292, inf
        %v296 = vsel %vm295, %v292, %v294
        %vm297 = vcmp.eq.f32.partialorder %v292, 0.0
        %v298 = vand.u32 %v292, 2147483648
        %v299 = vsel %vm297, %v298, %v296
        %s300 = vtos %v299
        %v301 = vstv %s300
        %v302 = vrcp.pop %v301
        %s303 = vtos %v302
        %s304 = smul.f32 %s284, %s303
        %v305 = vstv %s304
        %306 = vst [vmem:[%s196] sm:$0xff] %v305
      $region36: #{saliency_loss.1} parent=27 // pred_fallthru
        _
      %p307 = scmp.lt.s32.totalorder %s18, 1
      %s308 = scalar_select %p307, %s18, 1
      %s309 = smul.addr %s308, 8
      %s310 = scalar_lea.vmem %s2, %s309
      // Predicated region
      $region37: #{saliency_loss.1} parent=27 // pred_check
        %p311 = pneg %p106
      $region38: #{saliency_loss.1} parent=27 // pred_check_branch
        %313 = sbr.rel (%p311) target = $region40
      $region39: #{saliency_loss.1} parent=27 // pred_region
        _
      $region40: #{saliency_loss.1} parent=27 // pred_fallthru
        _
    $region28: #{saliency_loss.1} parent=5 // pred_fallthru
      _
    %p314 = scmp.le.s32.totalorder 2, %s8
    // Predicated region
    $region41: #{saliency_loss.1} parent=5 // pred_check
      %p315 = pneg %p314
    $region42: #{saliency_loss.1} parent=5 // pred_check_branch
      %317 = sbr.rel (%p315) target = $region44
    $region43: #{saliency_loss.1} parent=5 // pred_region
      %s318 = ssub.s32 %s8, 2
      // Predicated region
      $region45: #{saliency_loss.1} parent=43 // pred_check
        %p319 = pneg %p112
      $region46: #{saliency_loss.1} parent=43 // pred_check_branch
        %321 = sbr.rel (%p319) target = $region48
      $region47: #{saliency_loss.1} parent=43 // pred_region
        %p322 = scmp.lt.s32.totalorder %s21, 1
        %s323 = scalar_select %p322, %s21, 1
        %s324 = smul.addr %s323, 8
        %s325 = scalar_lea.vmem %s2, %s324
      $region48: #{saliency_loss.1} parent=43 // pred_fallthru
        _
    $region44: #{saliency_loss.1} parent=5 // pred_fallthru
      _
  $region6: #{saliency_loss.1} parent=0 // loop_footer
    %s12 = sadd.s32 1, %s8
  $region7: #{saliency_loss.1} parent=0 // loop_footer_branch
    %7 = sbr.rel target = $region3
  $region8: #{saliency_loss.1} parent=0 // loop_exit
    _

</llo_original>
